<compile_context>
chip_gen: v7x
topology: tpu7x:2x2x1
jax: 0.10.0
libtpu: 0.0.40
codegen_flags: <defaults>
</compile_context>

<pallas_src>
import functools
import math

import jax
import jax.numpy as jnp
from jax.experimental import pallas as pl
from jax.experimental.pallas import tpu as pltpu

IN_DIM = 512
H1 = 128          # dense_1 output (== dense_2 input)
H23 = 128         # folded (dense_2 o dense_3) output (== dense_4 input)
OUT_DIM = 3
OUT_PAD = 128     # lane-dense padded output width


def _round_up(n, m):
    return (n + m - 1) // m * m


def mlp_kernel(x_ref, w1_ref, b1_ref, w23_ref, b23_ref, w4_ref, b4_ref, o_ref):
    # x tile arrives f32 straight from HBM; cast to bf16 in-kernel so the
    # wrapper never performs a separate cast/pad pass over the input.
    x = x_ref[...].astype(jnp.bfloat16)
    # bf16 MXU matmuls with f32 accumulation; bias adds in f32.
    h = jnp.dot(x, w1_ref[...], preferred_element_type=jnp.float32) + b1_ref[...]
    h = jnp.dot(h.astype(jnp.bfloat16), w23_ref[...],
                preferred_element_type=jnp.float32) + b23_ref[...]
    out = jnp.dot(h.astype(jnp.bfloat16), w4_ref[...],
                  preferred_element_type=jnp.float32) + b4_ref[...]
    # bf16, 128-lane-dense store (unmasked vst); wrapper slices [:, :3].
    o_ref[...] = out.astype(o_ref.dtype)


def prepare_params(params):
    """One-time parameter prep (at init, NOT per forward call):
       - transpose torch-layout (out, in) weights to (in, out), cast to bf16
       - fold dense_2/dense_3 into one 128x128 affine map (computed in f32)
       - zero-pad the final layer to a lane-dense 128-wide output
       - biases kept f32, shaped (1, out) so they broadcast over batch rows
    """
    (w1, b1), (w2, b2), (w3, b3), (w4, b4) = [
        (jnp.asarray(w, jnp.float32), jnp.asarray(b, jnp.float32))
        for (w, b) in params
    ]

    w1t = w1.T                         # (512, 128)
    w23 = w2.T @ w3.T                  # (128, 512) @ (512, 128) -> (128, 128)
    b23 = b2 @ w3.T + b3               # (128,)

    w4p = jnp.zeros((H23, OUT_PAD), jnp.float32).at[:, :OUT_DIM].set(w4.T)
    b4p = jnp.zeros((OUT_PAD,), jnp.float32).at[:OUT_DIM].set(b4)

    return (w1t.astype(jnp.bfloat16), b1[None, :],
            w23.astype(jnp.bfloat16), b23[None, :],
            w4p.astype(jnp.bfloat16), b4p[None, :])


@functools.partial(jax.jit, static_argnames=("block_m",))
def classification_model_forward(x, prepared, block_m=1024):
    """x: (B, C, H, W) with C*H*W == 512. Returns (B, 3) float32."""
    B = x.shape[0]
    x2d = x.reshape(B, -1)             # nn.Flatten: free view, stays f32
    assert x2d.shape[1] == IN_DIM, f"expected flattened dim {IN_DIM}, got {x2d.shape[1]}"

    # Balanced batch tiling: minimize last-tile waste; guarantee >=2 grid steps
    # for large B so the "parallel" axis shards across v7x's two TensorCores.
    n_tiles = pl.cdiv(B, block_m)
    if n_tiles == 1 and B >= 256:
        n_tiles = 2
    if n_tiles == 1:
        tm = B                          # single tile: block == full array dims
    else:
        tm = _round_up(pl.cdiv(B, n_tiles), 16)
        n_tiles = pl.cdiv(B, tm)
    # No jnp.pad: Pallas masks the partial final block (rows are independent).

    w1, b1, w23, b23, w4, b4 = prepared

    def fixed(shape):
        # Same block every grid step -> weights/biases stay VMEM-resident.
        return pl.BlockSpec(shape, lambda i: (0, 0))

    weight_bytes = 2 * (IN_DIM * H1 + H1 * H23 + H23 * OUT_PAD)
    cost = pl.CostEstimate(
        flops=2 * B * (IN_DIM * H1 + H1 * H23 + H23 * OUT_PAD),
        transcendentals=0,
        bytes_accessed=B * IN_DIM * 4 + B * OUT_PAD * 2 + weight_bytes,
    )

    out = pl.pallas_call(
        mlp_kernel,
        out_shape=jax.ShapeDtypeStruct((B, OUT_PAD), jnp.bfloat16),
        grid=(n_tiles,),
        in_specs=[
            pl.BlockSpec((tm, IN_DIM), lambda i: (i, 0)),   # x batch tile (f32)
            fixed((IN_DIM, H1)), fixed((1, H1)),            # dense_1
            fixed((H1, H23)), fixed((1, H23)),              # dense_2 o dense_3 (folded)
            fixed((H23, OUT_PAD)), fixed((1, OUT_PAD)),     # dense_4 (lane-padded)
        ],
        out_specs=pl.BlockSpec((tm, OUT_PAD), lambda i: (i, 0)),
        compiler_params=pltpu.CompilerParams(
            dimension_semantics=("parallel",),
            vmem_limit_bytes=48 * 1024 * 1024),
        cost_estimate=cost,
    )(x2d, w1, b1, w23, b23, w4, b4)

    return out[:, :OUT_DIM].astype(jnp.float32)


def init_params(key):
    """Deterministic init mimicking torch.nn.Linear default (uniform +/- 1/sqrt(fan_in)),
    stored in torch layout: weight (out, in), bias (out,)."""
    dims = [(IN_DIM, 128), (128, 512), (512, 128), (128, OUT_DIM)]
    params = []
    for (fan_in, fan_out) in dims:
        key, kw, kb = jax.random.split(key, 3)
        bound = 1.0 / math.sqrt(fan_in)
        w = jax.random.uniform(kw, (fan_out, fan_in), jnp.float32, -bound, bound)
        b = jax.random.uniform(kb, (fan_out,), jnp.float32, -bound, bound)
        params.append((w, b))
    return params


def reference_forward_f32(x, params):
    """Exact f32 semantics of the torch module (4 separate layers)."""
    h = x.reshape(x.shape[0], -1)
    for (w, b) in params:
        h = h @ w.T + b
    return h


def reference_forward_matching(x, prepared):
    """Pure-JAX reference mirroring the kernel's numerics (bf16 in / f32 acc /
    folded middle layers / bf16 final store)."""
    w1, b1, w23, b23, w4, b4 = prepared
    h = x.reshape(x.shape[0], -1).astype(jnp.bfloat16)
    h = jnp.dot(h, w1, preferred_element_type=jnp.float32) + b1
    h = jnp.dot(h.astype(jnp.bfloat16), w23, preferred_element_type=jnp.float32) + b23
    h = jnp.dot(h.astype(jnp.bfloat16), w4, preferred_element_type=jnp.float32) + b4
    return h.astype(jnp.bfloat16)[:, :OUT_DIM].astype(jnp.float32)


if __name__ == "__main__":
    key = jax.random.PRNGKey(0)
    key, kx = jax.random.split(key)

    # B=2, C=2, H=W=16 -> flattens to 512 features (matches dense_1 input).
    x = jax.random.normal(kx, (2, 2, 16, 16), jnp.float32)
    params = init_params(key)
    prepared = prepare_params(params)

    out = classification_model_forward(x, prepared)
    out = jax.block_until_ready(out)
    assert out.shape == (2, OUT_DIM), out.shape

    # Tight check against a reference with identical bf16/f32 numerics.
    ref_match = reference_forward_matching(x, prepared)
    assert jnp.allclose(out, ref_match, atol=2e-2, rtol=2e-2), "mismatch vs bf16 JAX reference"

    # Loose check against the exact f32 module semantics (bf16 rounding slack).
    ref_f32 = reference_forward_f32(x, params)
    assert jnp.allclose(out, ref_f32, atol=1e-1, rtol=1e-1), "mismatch vs f32 JAX reference"

    print("KERNEL_OK")
</pallas_src>

<mosaic_0001>
module attributes {stable_mosaic.version = 11 : i64} {
  func.func @mlp_kernel(%arg0: i32, %arg1: memref<2x512xf32, #tpu.memory_space<vmem>>, %arg2: memref<512x128xbf16, #tpu.memory_space<vmem>>, %arg3: memref<1x128xf32, #tpu.memory_space<vmem>>, %arg4: memref<128x128xbf16, #tpu.memory_space<vmem>>, %arg5: memref<1x128xf32, #tpu.memory_space<vmem>>, %arg6: memref<128x128xbf16, #tpu.memory_space<vmem>>, %arg7: memref<1x128xf32, #tpu.memory_space<vmem>>, %arg8: memref<2x128xbf16, #tpu.memory_space<vmem>>) attributes {dimension_semantics = [#tpu.dimension_semantics<parallel>], iteration_bounds = array<i64: 1>, scalar_prefetch = 0 : i64, scratch_operands = 0 : i64, tpu.core_type = #tpu.core_type<tc>, window_params = [{transform_indices = @transform_0, window_bounds = array<i64: 2, 512>}, {pipeline_mode = #tpu.pipeline_mode<synchronous>, transform_indices = @transform_1, window_bounds = array<i64: 512, 128>}, {pipeline_mode = #tpu.pipeline_mode<synchronous>, transform_indices = @transform_2, window_bounds = array<i64: 1, 128>}, {pipeline_mode = #tpu.pipeline_mode<synchronous>, transform_indices = @transform_3, window_bounds = array<i64: 128, 128>}, {pipeline_mode = #tpu.pipeline_mode<synchronous>, transform_indices = @transform_4, window_bounds = array<i64: 1, 128>}, {pipeline_mode = #tpu.pipeline_mode<synchronous>, transform_indices = @transform_5, window_bounds = array<i64: 128, 128>}, {pipeline_mode = #tpu.pipeline_mode<synchronous>, transform_indices = @transform_6, window_bounds = array<i64: 1, 128>}, {transform_indices = @transform_7, window_bounds = array<i64: 2, 128>}]} {
    %c0 = arith.constant 0 : index
    %c0_0 = arith.constant 0 : index
    %0 = vector.load %arg1[%c0, %c0_0] : memref<2x512xf32, #tpu.memory_space<vmem>>, vector<2x512xf32>
    %1 = arith.truncf %0 : vector<2x512xf32> to vector<2x512xbf16>
    %c0_1 = arith.constant 0 : index
    %c0_2 = arith.constant 0 : index
    %2 = vector.load %arg2[%c0_1, %c0_2] : memref<512x128xbf16, #tpu.memory_space<vmem>>, vector<512x128xbf16>
    %cst = arith.constant dense<0.000000e+00> : vector<2x128xf32>
    %3 = tpu.matmul %1, %2, %cst {dimension_numbers = #tpu.dot_dimension_numbers<[1], [0], [0], [1], [0, 0, 1, 1], [], []>} : vector<2x512xbf16>, vector<512x128xbf16>, vector<2x128xf32> -> vector<2x128xf32>
    %c0_3 = arith.constant 0 : index
    %c0_4 = arith.constant 0 : index
    %4 = vector.load %arg3[%c0_3, %c0_4] : memref<1x128xf32, #tpu.memory_space<vmem>>, vector<1x128xf32>
    %5 = vector.broadcast %4 : vector<1x128xf32> to vector<2x128xf32>
    %6 = arith.addf %3, %5 : vector<2x128xf32>
    %7 = arith.truncf %6 : vector<2x128xf32> to vector<2x128xbf16>
    %c0_5 = arith.constant 0 : index
    %c0_6 = arith.constant 0 : index
    %8 = vector.load %arg4[%c0_5, %c0_6] : memref<128x128xbf16, #tpu.memory_space<vmem>>, vector<128x128xbf16>
    %cst_7 = arith.constant dense<0.000000e+00> : vector<2x128xf32>
    %9 = tpu.matmul %7, %8, %cst_7 {dimension_numbers = #tpu.dot_dimension_numbers<[1], [0], [0], [1], [0, 0, 1, 1], [], []>} : vector<2x128xbf16>, vector<128x128xbf16>, vector<2x128xf32> -> vector<2x128xf32>
    %c0_8 = arith.constant 0 : index
    %c0_9 = arith.constant 0 : index
    %10 = vector.load %arg5[%c0_8, %c0_9] : memref<1x128xf32, #tpu.memory_space<vmem>>, vector<1x128xf32>
    %11 = vector.broadcast %10 : vector<1x128xf32> to vector<2x128xf32>
    %12 = arith.addf %9, %11 : vector<2x128xf32>
    %13 = arith.truncf %12 : vector<2x128xf32> to vector<2x128xbf16>
    %c0_10 = arith.constant 0 : index
    %c0_11 = arith.constant 0 : index
    %14 = vector.load %arg6[%c0_10, %c0_11] : memref<128x128xbf16, #tpu.memory_space<vmem>>, vector<128x128xbf16>
    %cst_12 = arith.constant dense<0.000000e+00> : vector<2x128xf32>
    %15 = tpu.matmul %13, %14, %cst_12 {dimension_numbers = #tpu.dot_dimension_numbers<[1], [0], [0], [1], [0, 0, 1, 1], [], []>} : vector<2x128xbf16>, vector<128x128xbf16>, vector<2x128xf32> -> vector<2x128xf32>
    %c0_13 = arith.constant 0 : index
    %c0_14 = arith.constant 0 : index
    %16 = vector.load %arg7[%c0_13, %c0_14] : memref<1x128xf32, #tpu.memory_space<vmem>>, vector<1x128xf32>
    %17 = vector.broadcast %16 : vector<1x128xf32> to vector<2x128xf32>
    %18 = arith.addf %15, %17 : vector<2x128xf32>
    %19 = arith.truncf %18 : vector<2x128xf32> to vector<2x128xbf16>
    %c0_15 = arith.constant 0 : index
    %c0_16 = arith.constant 0 : index
    %20 = vector.load %arg8[%c0_15, %c0_16] : memref<2x128xbf16, #tpu.memory_space<vmem>>, vector<2x128xbf16>
    tpu.vector_store %arg8[%c0_15, %c0_16], %19 {strides = array<i32>} : memref<2x128xbf16, #tpu.memory_space<vmem>>, vector<2x128xbf16>,
    return
  }
  func.func @transform_0(%arg0: i32) -> (i32, i32) {
    %c0_i32 = arith.constant 0 : i32
    %c0_i32_0 = arith.constant 0 : i32
    return %arg0, %c0_i32 : i32, i32
  }
  func.func @transform_1(%arg0: i32) -> (i32, i32) {
    %c0_i32 = arith.constant 0 : i32
    %c0_i32_0 = arith.constant 0 : i32
    %c0_i32_1 = arith.constant 0 : i32
    return %c0_i32, %c0_i32_0 : i32, i32
  }
  func.func @transform_2(%arg0: i32) -> (i32, i32) {
    %c0_i32 = arith.constant 0 : i32
    %c0_i32_0 = arith.constant 0 : i32
    %c0_i32_1 = arith.constant 0 : i32
    return %c0_i32, %c0_i32_0 : i32, i32
  }
  func.func @transform_3(%arg0: i32) -> (i32, i32) {
    %c0_i32 = arith.constant 0 : i32
    %c0_i32_0 = arith.constant 0 : i32
    %c0_i32_1 = arith.constant 0 : i32
    return %c0_i32, %c0_i32_0 : i32, i32
  }
  func.func @transform_4(%arg0: i32) -> (i32, i32) {
    %c0_i32 = arith.constant 0 : i32
    %c0_i32_0 = arith.constant 0 : i32
    %c0_i32_1 = arith.constant 0 : i32
    return %c0_i32, %c0_i32_0 : i32, i32
  }
  func.func @transform_5(%arg0: i32) -> (i32, i32) {
    %c0_i32 = arith.constant 0 : i32
    %c0_i32_0 = arith.constant 0 : i32
    %c0_i32_1 = arith.constant 0 : i32
    return %c0_i32, %c0_i32_0 : i32, i32
  }
  func.func @transform_6(%arg0: i32) -> (i32, i32) {
    %c0_i32 = arith.constant 0 : i32
    %c0_i32_0 = arith.constant 0 : i32
    %c0_i32_1 = arith.constant 0 : i32
    return %c0_i32, %c0_i32_0 : i32, i32
  }
  func.func @transform_7(%arg0: i32) -> (i32, i32) {
    %c0_i32 = arith.constant 0 : i32
    %c0_i32_0 = arith.constant 0 : i32
    return %arg0, %c0_i32 : i32, i32
  }
}

</mosaic_0001>

<llo_original>
// kernel: classification_model_forward.1
$region0: #{classification_model_forward.1}
  #allocation0 [shape = 'u32[]', space=smem, size = 0x4, offset = 0x4, fixed_abs, tag = 'smem constant byte address 0x4 - core index']
  #allocation1 [shape = 'u32[144,128]{1,0:T(1,128)}', space=vmem, size = 0x12000, scoped, tag = 'internal scratch']
  %s0 = inlined_call_operand.vmem [shape: f32[2,512], index: 0, kind: input, shape index: {}]
  %s1 = inlined_call_operand.hbm [shape: bf16[512,128], index: 1, kind: input, shape index: {}]
  %s2 = inlined_call_operand.vmem [shape: f32[1,128], index: 2, kind: input, shape index: {}]
  %s3 = inlined_call_operand.vmem [shape: bf16[128,128], index: 3, kind: input, shape index: {}]
  %s4 = inlined_call_operand.vmem [shape: f32[1,128], index: 4, kind: input, shape index: {}]
  %s5 = inlined_call_operand.hbm [shape: bf16[128,128], index: 5, kind: input, shape index: {}]
  %s6 = inlined_call_operand.vmem [shape: f32[1,128], index: 6, kind: input, shape index: {}]
  %s7 = inlined_call_operand.vmem [shape: bf16[2,128], index: 7, kind: output, shape index: {}]
  %s8 = sld [smem:[#allocation0]]
  $region46: #{classification_model_forward.1} parent=0
    _
  %s10 = ssub.s32 1, %s8
  %s11 = scalar_select 0, %s10, %s8
  $region1: #{classification_model_forward.1} parent=0
    #allocation2 [shape = 'u8[131072]{0}', space=vmem, size = 0x20000, scoped, tag = 'input window, operand 1, single buffered']
    #allocation3 [shape = 's32[1]{0}', space=sflag, size = 0x4, scoped, tag = 'scoped memory for classification_model_forward.1']
    #allocation4 [shape = 'u8[32768]{0}', space=vmem, size = 0x8000, scoped, tag = 'input window, operand 5, single buffered']
    #allocation5 [shape = 's32[1]{0}', space=sflag, size = 0x4, scoped, tag = 'scoped memory for classification_model_forward.1']
    %12 = vsyncpa [#allocation3], 0
    %13 = vsyncpa [#allocation5], 0
    // Predicated region
    $region2: #{classification_model_forward.1} parent=1 // pred_check
      _
    $region3: #{classification_model_forward.1} parent=1 // pred_check_branch
      %15 = sbr.rel (0) target = $region5
    $region4: #{classification_model_forward.1} parent=1 // pred_region
      _
    $region5: #{classification_model_forward.1} parent=1 // pred_fallthru
      _
    // Predicated region
    $region6: #{classification_model_forward.1} parent=1 // pred_check
      _
    $region7: #{classification_model_forward.1} parent=1 // pred_check_branch
      %17 = sbr.rel (0) target = $region9
    $region8: #{classification_model_forward.1} parent=1 // pred_region
      %s19 = ssub.s32 4096, 4096
      %20 = vsyncadd [#allocation3], %s19
      %s21 = sshll.u32 [#allocation2], 4
      %s22 = int_to_ptr.vmem [resolvable:$true] %s21
      %27 = dma.hbm_to_vmem [thread:$0]  %s1, 4096, %s22, [#allocation3], 64, 64, 4
    $region9: #{classification_model_forward.1} parent=1 // pred_fallthru
      _
    // Predicated region
    $region10: #{classification_model_forward.1} parent=1 // pred_check
      _
    $region11: #{classification_model_forward.1} parent=1 // pred_check_branch
      %29 = sbr.rel (0) target = $region13
    $region12: #{classification_model_forward.1} parent=1 // pred_region
      _
    $region13: #{classification_model_forward.1} parent=1 // pred_fallthru
      _
    // Predicated region
    $region14: #{classification_model_forward.1} parent=1 // pred_check
      _
    $region15: #{classification_model_forward.1} parent=1 // pred_check_branch
      %31 = sbr.rel (0) target = $region17
    $region16: #{classification_model_forward.1} parent=1 // pred_region
      _
    $region17: #{classification_model_forward.1} parent=1 // pred_fallthru
      _
    // Predicated region
    $region18: #{classification_model_forward.1} parent=1 // pred_check
      _
    $region19: #{classification_model_forward.1} parent=1 // pred_check_branch
      %33 = sbr.rel (0) target = $region21
    $region20: #{classification_model_forward.1} parent=1 // pred_region
      _
    $region21: #{classification_model_forward.1} parent=1 // pred_fallthru
      _
    // Predicated region
    $region22: #{classification_model_forward.1} parent=1 // pred_check
      _
    $region23: #{classification_model_forward.1} parent=1 // pred_check_branch
      %35 = sbr.rel (0) target = $region25
    $region24: #{classification_model_forward.1} parent=1 // pred_region
      %s37 = ssub.s32 1024, 1024
      %38 = vsyncadd [#allocation5], %s37
      %s39 = sshll.u32 [#allocation4], 4
      %s40 = int_to_ptr.vmem [resolvable:$true] %s39
      %45 = dma.hbm_to_vmem [thread:$0]  %s5, 1024, %s40, [#allocation5], 64, 64, 4
    $region25: #{classification_model_forward.1} parent=1 // pred_fallthru
      _
    // Predicated region
    $region26: #{classification_model_forward.1} parent=1 // pred_check
      _
    $region27: #{classification_model_forward.1} parent=1 // pred_check_branch
      %47 = sbr.rel (0) target = $region29
    $region28: #{classification_model_forward.1} parent=1 // pred_region
      _
    $region29: #{classification_model_forward.1} parent=1 // pred_fallthru
      _
    // Predicated region
    $region30: #{classification_model_forward.1} parent=1 // pred_check
      _
    $region31: #{classification_model_forward.1} parent=1 // pred_check_branch
      %49 = sbr.rel (0) target = $region33
    $region32: #{classification_model_forward.1} parent=1 // pred_region
      %50 = dma.done [#allocation3], 4096
    $region33: #{classification_model_forward.1} parent=1 // pred_fallthru
      _
    // Predicated region
    $region34: #{classification_model_forward.1} parent=1 // pred_check
      _
    $region35: #{classification_model_forward.1} parent=1 // pred_check_branch
      %52 = sbr.rel (0) target = $region37
    $region36: #{classification_model_forward.1} parent=1 // pred_region
      %53 = dma.done [#allocation5], 1024
    $region37: #{classification_model_forward.1} parent=1 // pred_fallthru
      _
    %v55 = vld [vmem:[%s0] sm:$0xff]
    %v57 = vcombine.high %v55, %v55
    %v59 = vunpack.c.l.s4 1983009808
    %v60 = vunpack.c.0.s8 %v59
    %v61 = vlaneseq
    %v62 = vshrl.u32 %v61, 7
    %v63 = vsub.s32 %v60, %v62
    %v64 = vrot.slane %v55, %v63
    %v66 = vunpack.c.l.s4 1983009808
    %v67 = vunpack.c.0.s8 %v66
    %v68 = vlaneseq
    %v69 = vshrl.u32 %v68, 7
    %v70 = vsub.s32 %v67, %v69
    %v71 = vrot.slane %v57, %v70
    %v72 = vcombine.high %v64, %v64
    %v73 = vcombine.high %v71, %v71
    %v78 = vpack.c.bf16 %v64, %v64
    %v79 = vpack.c.bf16 %v72, %v72
    %v80 = vpack.c.bf16 %v71, %v71
    %v81 = vpack.c.bf16 %v73, %v73
    %v82 = vld [vmem:[#allocation2] sm:$0xf]
    %v83 = vld [vmem:[#allocation2 + $0x4] sm:$0xf]
    %v84 = vld [vmem:[#allocation2 + $0x8] sm:$0xf]
    %v85 = vld [vmem:[#allocation2 + $0xc] sm:$0xf]
    %v86 = vld [vmem:[#allocation2 + $0x10] sm:$0xf]
    %v87 = vld [vmem:[#allocation2 + $0x14] sm:$0xf]
    %v88 = vld [vmem:[#allocation2 + $0x18] sm:$0xf]
    %v89 = vld [vmem:[#allocation2 + $0x1c] sm:$0xf]
    %v90 = vld [vmem:[#allocation2 + $0x20] sm:$0xf]
    %v91 = vld [vmem:[#allocation2 + $0x24] sm:$0xf]
    %v92 = vld [vmem:[#allocation2 + $0x28] sm:$0xf]
    %v93 = vld [vmem:[#allocation2 + $0x2c] sm:$0xf]
    %v94 = vld [vmem:[#allocation2 + $0x30] sm:$0xf]
    %v95 = vld [vmem:[#allocation2 + $0x34] sm:$0xf]
    %v96 = vld [vmem:[#allocation2 + $0x38] sm:$0xf]
    %v97 = vld [vmem:[#allocation2 + $0x3c] sm:$0xf]
    %v98 = vld [vmem:[#allocation2 + $0x40] sm:$0xf]
    %v99 = vld [vmem:[#allocation2 + $0x44] sm:$0xf]
    %v100 = vld [vmem:[#allocation2 + $0x48] sm:$0xf]
    %v101 = vld [vmem:[#allocation2 + $0x4c] sm:$0xf]
    %v102 = vld [vmem:[#allocation2 + $0x50] sm:$0xf]
    %v103 = vld [vmem:[#allocation2 + $0x54] sm:$0xf]
    %v104 = vld [vmem:[#allocation2 + $0x58] sm:$0xf]
    %v105 = vld [vmem:[#allocation2 + $0x5c] sm:$0xf]
    %v106 = vld [vmem:[#allocation2 + $0x60] sm:$0xf]
    %v107 = vld [vmem:[#allocation2 + $0x64] sm:$0xf]
    %v108 = vld [vmem:[#allocation2 + $0x68] sm:$0xf]
    %v109 = vld [vmem:[#allocation2 + $0x6c] sm:$0xf]
    %v110 = vld [vmem:[#allocation2 + $0x70] sm:$0xf]
    %v111 = vld [vmem:[#allocation2 + $0x74] sm:$0xf]
    %v112 = vld [vmem:[#allocation2 + $0x78] sm:$0xf]
    %v113 = vld [vmem:[#allocation2 + $0x7c] sm:$0xf]
    %v114 = vld [vmem:[#allocation2 + $0x80] sm:$0xf]
    %v115 = vld [vmem:[#allocation2 + $0x84] sm:$0xf]
    %v116 = vld [vmem:[#allocation2 + $0x88] sm:$0xf]
    %v117 = vld [vmem:[#allocation2 + $0x8c] sm:$0xf]
    %v118 = vld [vmem:[#allocation2 + $0x90] sm:$0xf]
    %v119 = vld [vmem:[#allocation2 + $0x94] sm:$0xf]
    %v120 = vld [vmem:[#allocation2 + $0x98] sm:$0xf]
    %v121 = vld [vmem:[#allocation2 + $0x9c] sm:$0xf]
    %v122 = vld [vmem:[#allocation2 + $0xa0] sm:$0xf]
    %v123 = vld [vmem:[#allocation2 + $0xa4] sm:$0xf]
    %v124 = vld [vmem:[#allocation2 + $0xa8] sm:$0xf]
    %v125 = vld [vmem:[#allocation2 + $0xac] sm:$0xf]
    %v126 = vld [vmem:[#allocation2 + $0xb0] sm:$0xf]
    %v127 = vld [vmem:[#allocation2 + $0xb4] sm:$0xf]
    %v128 = vld [vmem:[#allocation2 + $0xb8] sm:$0xf]
    %v129 = vld [vmem:[#allocation2 + $0xbc] sm:$0xf]
    %v130 = vld [vmem:[#allocation2 + $0xc0] sm:$0xf]
    %v131 = vld [vmem:[#allocation2 + $0xc4] sm:$0xf]
    %v132 = vld [vmem:[#allocation2 + $0xc8] sm:$0xf]
    %v133 = vld [vmem:[#allocation2 + $0xcc] sm:$0xf]
    %v134 = vld [vmem:[#allocation2 + $0xd0] sm:$0xf]
    %v135 = vld [vmem:[#allocation2 + $0xd4] sm:$0xf]
    %v136 = vld [vmem:[#allocation2 + $0xd8] sm:$0xf]
    %v137 = vld [vmem:[#allocation2 + $0xdc] sm:$0xf]
    %v138 = vld [vmem:[#allocation2 + $0xe0] sm:$0xf]
    %v139 = vld [vmem:[#allocation2 + $0xe4] sm:$0xf]
    %v140 = vld [vmem:[#allocation2 + $0xe8] sm:$0xf]
    %v141 = vld [vmem:[#allocation2 + $0xec] sm:$0xf]
    %v142 = vld [vmem:[#allocation2 + $0xf0] sm:$0xf]
    %v143 = vld [vmem:[#allocation2 + $0xf4] sm:$0xf]
    %v144 = vld [vmem:[#allocation2 + $0xf8] sm:$0xf]
    %v145 = vld [vmem:[#allocation2 + $0xfc] sm:$0xf]
    %v146 = vld [vmem:[%s2] sm:$0x1]
    %v148 = vlaneseq
    %v149 = vshrl.u32 %v148, 7
    %v150 = vsub.s32 0, %v149
    %v151 = vrot.slane %v146, %v150
    %v217 = vunpack.c.l.b16 %v82
    %v218 = vunpack.c.l.b16 %v83
    %v219 = vunpack.c.l.b16 %v84
    %v220 = vunpack.c.l.b16 %v85
    %v221 = vunpack.c.l.b16 %v86
    %v222 = vunpack.c.l.b16 %v87
    %v223 = vunpack.c.l.b16 %v88
    %v224 = vunpack.c.l.b16 %v89
    %v225 = vunpack.c.l.b16 %v90
    %v226 = vunpack.c.l.b16 %v91
    %v227 = vunpack.c.l.b16 %v92
    %v228 = vunpack.c.l.b16 %v93
    %v229 = vunpack.c.l.b16 %v94
    %v230 = vunpack.c.l.b16 %v95
    %v231 = vunpack.c.l.b16 %v96
    %v232 = vunpack.c.l.b16 %v97
    %v233 = vunpack.c.l.b16 %v98
    %v234 = vunpack.c.l.b16 %v99
    %v235 = vunpack.c.l.b16 %v100
    %v236 = vunpack.c.l.b16 %v101
    %v237 = vunpack.c.l.b16 %v102
    %v238 = vunpack.c.l.b16 %v103
    %v239 = vunpack.c.l.b16 %v104
    %v240 = vunpack.c.l.b16 %v105
    %v241 = vunpack.c.l.b16 %v106
    %v242 = vunpack.c.l.b16 %v107
    %v243 = vunpack.c.l.b16 %v108
    %v244 = vunpack.c.l.b16 %v109
    %v245 = vunpack.c.l.b16 %v110
    %v246 = vunpack.c.l.b16 %v111
    %v247 = vunpack.c.l.b16 %v112
    %v248 = vunpack.c.l.b16 %v113
    %v249 = vunpack.c.l.b16 %v114
    %v250 = vunpack.c.l.b16 %v115
    %v251 = vunpack.c.l.b16 %v116
    %v252 = vunpack.c.l.b16 %v117
    %v253 = vunpack.c.l.b16 %v118
    %v254 = vunpack.c.l.b16 %v119
    %v255 = vunpack.c.l.b16 %v120
    %v256 = vunpack.c.l.b16 %v121
    %v257 = vunpack.c.l.b16 %v122
    %v258 = vunpack.c.l.b16 %v123
    %v259 = vunpack.c.l.b16 %v124
    %v260 = vunpack.c.l.b16 %v125
    %v261 = vunpack.c.l.b16 %v126
    %v262 = vunpack.c.l.b16 %v127
    %v263 = vunpack.c.l.b16 %v128
    %v264 = vunpack.c.l.b16 %v129
    %v265 = vunpack.c.l.b16 %v130
    %v266 = vunpack.c.l.b16 %v131
    %v267 = vunpack.c.l.b16 %v132
    %v268 = vunpack.c.l.b16 %v133
    %v269 = vunpack.c.l.b16 %v134
    %v270 = vunpack.c.l.b16 %v135
    %v271 = vunpack.c.l.b16 %v136
    %v272 = vunpack.c.l.b16 %v137
    %v273 = vunpack.c.l.b16 %v138
    %v274 = vunpack.c.l.b16 %v139
    %v275 = vunpack.c.l.b16 %v140
    %v276 = vunpack.c.l.b16 %v141
    %v277 = vunpack.c.l.b16 %v142
    %v278 = vunpack.c.l.b16 %v143
    %v279 = vunpack.c.l.b16 %v144
    %v280 = vunpack.c.l.b16 %v145
    %v281 = vpack.c.b16 %v218, %v217
    %v282 = vpack.c.b16 %v220, %v219
    %v283 = vpack.c.b16 %v222, %v221
    %v284 = vpack.c.b16 %v224, %v223
    %v285 = vpack.c.b16 %v226, %v225
    %v286 = vpack.c.b16 %v228, %v227
    %v287 = vpack.c.b16 %v230, %v229
    %v288 = vpack.c.b16 %v232, %v231
    %v289 = vpack.c.b16 %v234, %v233
    %v290 = vpack.c.b16 %v236, %v235
    %v291 = vpack.c.b16 %v238, %v237
    %v292 = vpack.c.b16 %v240, %v239
    %v293 = vpack.c.b16 %v242, %v241
    %v294 = vpack.c.b16 %v244, %v243
    %v295 = vpack.c.b16 %v246, %v245
    %v296 = vpack.c.b16 %v248, %v247
    %v297 = vpack.c.b16 %v250, %v249
    %v298 = vpack.c.b16 %v252, %v251
    %v299 = vpack.c.b16 %v254, %v253
    %v300 = vpack.c.b16 %v256, %v255
    %v301 = vpack.c.b16 %v258, %v257
    %v302 = vpack.c.b16 %v260, %v259
    %v303 = vpack.c.b16 %v262, %v261
    %v304 = vpack.c.b16 %v264, %v263
    %v305 = vpack.c.b16 %v266, %v265
    %v306 = vpack.c.b16 %v268, %v267
    %v307 = vpack.c.b16 %v270, %v269
    %v308 = vpack.c.b16 %v272, %v271
    %v309 = vpack.c.b16 %v274, %v273
    %v310 = vpack.c.b16 %v276, %v275
    %v311 = vpack.c.b16 %v278, %v277
    %v312 = vpack.c.b16 %v280, %v279
    %345 = vmatprep.subr.bf16.mxu0 0
    %346 = vmatpush1.bf16.msra.mxu0 %v281
    %347 = vmatprep.subr.bf16.mxu0 0
    %348 = vmatpush1.bf16.msra.mxu0 %v282
    %349 = vmatprep.subr.bf16.mxu0 0
    %350 = vmatpush1.bf16.msra.mxu0 %v283
    %351 = vmatprep.subr.bf16.mxu0 0
    %352 = vmatpush1.bf16.msra.mxu0 %v284
    %353 = vmatprep.subr.bf16.mxu0 0
    %354 = vmatpush1.bf16.msra.mxu0 %v285
    %355 = vmatprep.subr.bf16.mxu0 0
    %356 = vmatpush1.bf16.msra.mxu0 %v286
    %357 = vmatprep.subr.bf16.mxu0 0
    %358 = vmatpush1.bf16.msra.mxu0 %v287
    %359 = vmatprep.subr.bf16.mxu0 0
    %360 = vmatpush1.bf16.msra.mxu0 %v288
    %361 = vmatprep.subr.bf16.mxu0 0
    %362 = vmatpush1.bf16.msra.mxu0 %v289
    %363 = vmatprep.subr.bf16.mxu0 0
    %364 = vmatpush1.bf16.msra.mxu0 %v290
    %365 = vmatprep.subr.bf16.mxu0 0
    %366 = vmatpush1.bf16.msra.mxu0 %v291
    %367 = vmatprep.subr.bf16.mxu0 0
    %368 = vmatpush1.bf16.msra.mxu0 %v292
    %369 = vmatprep.subr.bf16.mxu0 0
    %370 = vmatpush1.bf16.msra.mxu0 %v293
    %371 = vmatprep.subr.bf16.mxu0 0
    %372 = vmatpush1.bf16.msra.mxu0 %v294
    %373 = vmatprep.subr.bf16.mxu0 0
    %374 = vmatpush1.bf16.msra.mxu0 %v295
    %375 = vmatprep.subr.bf16.mxu0 0
    %376 = vmatpush1.bf16.msra.mxu0 %v296
    %377 = vmatprep.mubr.bf16.mxu0 %v79
    %378 = vmatmul.mubr.bf16.gmra.mrb[0].mxu0 %v78
    %v379 = vpop.f32.mrb[0].mxu0
    %v380 = vadd.f32 %v151, %v379
    %v381 = vpop.f32.mrb[0].mxu0
    %v382 = vpop.f32.mrb[0].mxu0
    %v383 = vpop.f32.mrb[0].mxu0
    %384 = vdwg.mxu0
    %385 = vmatprep.subr.bf16.mxu0 0
    %386 = vmatpush1.bf16.msra.mxu0 %v297
    %387 = vmatprep.subr.bf16.mxu0 0
    %388 = vmatpush1.bf16.msra.mxu0 %v298
    %389 = vmatprep.subr.bf16.mxu0 0
    %390 = vmatpush1.bf16.msra.mxu0 %v299
    %391 = vmatprep.subr.bf16.mxu0 0
    %392 = vmatpush1.bf16.msra.mxu0 %v300
    %393 = vmatprep.subr.bf16.mxu0 0
    %394 = vmatpush1.bf16.msra.mxu0 %v301
    %395 = vmatprep.subr.bf16.mxu0 0
    %396 = vmatpush1.bf16.msra.mxu0 %v302
    %397 = vmatprep.subr.bf16.mxu0 0
    %398 = vmatpush1.bf16.msra.mxu0 %v303
    %399 = vmatprep.subr.bf16.mxu0 0
    %400 = vmatpush1.bf16.msra.mxu0 %v304
    %401 = vmatprep.subr.bf16.mxu0 0
    %402 = vmatpush1.bf16.msra.mxu0 %v305
    %403 = vmatprep.subr.bf16.mxu0 0
    %404 = vmatpush1.bf16.msra.mxu0 %v306
    %405 = vmatprep.subr.bf16.mxu0 0
    %406 = vmatpush1.bf16.msra.mxu0 %v307
    %407 = vmatprep.subr.bf16.mxu0 0
    %408 = vmatpush1.bf16.msra.mxu0 %v308
    %409 = vmatprep.subr.bf16.mxu0 0
    %410 = vmatpush1.bf16.msra.mxu0 %v309
    %411 = vmatprep.subr.bf16.mxu0 0
    %412 = vmatpush1.bf16.msra.mxu0 %v310
    %413 = vmatprep.subr.bf16.mxu0 0
    %414 = vmatpush1.bf16.msra.mxu0 %v311
    %415 = vmatprep.subr.bf16.mxu0 0
    %416 = vmatpush1.bf16.msra.mxu0 %v312
    %417 = vmatprep.mubr.bf16.mxu0 %v81
    %418 = vmatmul.mubr.bf16.gmra.mrb[0].mxu0 %v80
    %v419 = vpop.f32.mrb[0].mxu0
    %v420 = vadd.f32 %v380, %v419
    %v421 = vpop.f32.mrb[0].mxu0
    %v422 = vpop.f32.mrb[0].mxu0
    %v423 = vpop.f32.mrb[0].mxu0
    %424 = vdwg.mxu0
    %v425 = vpack.c.bf16 %v420, %v420
    %v426 = vld [vmem:[%s3] sm:$0xf]
    %v427 = vld [vmem:[%s3 + $0x4] sm:$0xf]
    %v428 = vld [vmem:[%s3 + $0x8] sm:$0xf]
    %v429 = vld [vmem:[%s3 + $0xc] sm:$0xf]
    %v430 = vld [vmem:[%s3 + $0x10] sm:$0xf]
    %v431 = vld [vmem:[%s3 + $0x14] sm:$0xf]
    %v432 = vld [vmem:[%s3 + $0x18] sm:$0xf]
    %v433 = vld [vmem:[%s3 + $0x1c] sm:$0xf]
    %v434 = vld [vmem:[%s3 + $0x20] sm:$0xf]
    %v435 = vld [vmem:[%s3 + $0x24] sm:$0xf]
    %v436 = vld [vmem:[%s3 + $0x28] sm:$0xf]
    %v437 = vld [vmem:[%s3 + $0x2c] sm:$0xf]
    %v438 = vld [vmem:[%s3 + $0x30] sm:$0xf]
    %v439 = vld [vmem:[%s3 + $0x34] sm:$0xf]
    %v440 = vld [vmem:[%s3 + $0x38] sm:$0xf]
    %v441 = vld [vmem:[%s3 + $0x3c] sm:$0xf]
    %v442 = vld [vmem:[%s4] sm:$0x1]
    %v444 = vlaneseq
    %v445 = vshrl.u32 %v444, 7
    %v446 = vsub.s32 0, %v445
    %v447 = vrot.slane %v442, %v446
    %v465 = vunpack.c.l.b16 %v426
    %v466 = vunpack.c.l.b16 %v427
    %v467 = vunpack.c.l.b16 %v428
    %v468 = vunpack.c.l.b16 %v429
    %v469 = vunpack.c.l.b16 %v430
    %v470 = vunpack.c.l.b16 %v431
    %v471 = vunpack.c.l.b16 %v432
    %v472 = vunpack.c.l.b16 %v433
    %v473 = vunpack.c.l.b16 %v434
    %v474 = vunpack.c.l.b16 %v435
    %v475 = vunpack.c.l.b16 %v436
    %v476 = vunpack.c.l.b16 %v437
    %v477 = vunpack.c.l.b16 %v438
    %v478 = vunpack.c.l.b16 %v439
    %v479 = vunpack.c.l.b16 %v440
    %v480 = vunpack.c.l.b16 %v441
    %v481 = vpack.c.b16 %v466, %v465
    %v482 = vpack.c.b16 %v468, %v467
    %v483 = vpack.c.b16 %v470, %v469
    %v484 = vpack.c.b16 %v472, %v471
    %v485 = vpack.c.b16 %v474, %v473
    %v486 = vpack.c.b16 %v476, %v475
    %v487 = vpack.c.b16 %v478, %v477
    %v488 = vpack.c.b16 %v480, %v479
    %497 = vmatprep.subr.bf16.mxu0 0
    %498 = vmatpush1.bf16.msra.mxu0 %v481
    %499 = vmatprep.subr.bf16.mxu0 0
    %500 = vmatpush1.bf16.msra.mxu0 %v482
    %501 = vmatprep.subr.bf16.mxu0 0
    %502 = vmatpush1.bf16.msra.mxu0 %v483
    %503 = vmatprep.subr.bf16.mxu0 0
    %504 = vmatpush1.bf16.msra.mxu0 %v484
    %505 = vmatprep.subr.bf16.mxu0 0
    %506 = vmatpush1.bf16.msra.mxu0 %v485
    %507 = vmatprep.subr.bf16.mxu0 0
    %508 = vmatpush1.bf16.msra.mxu0 %v486
    %509 = vmatprep.subr.bf16.mxu0 0
    %510 = vmatpush1.bf16.msra.mxu0 %v487
    %511 = vmatprep.subr.bf16.mxu0 0
    %512 = vmatpush1.bf16.msra.mxu0 %v488
    %513 = vmatprep.subr.bf16.mxu0 0
    %514 = vmatpush1.bf16.msra.mxu0 0
    %515 = vmatprep.subr.bf16.mxu0 0
    %516 = vmatpush1.bf16.msra.mxu0 0
    %517 = vmatprep.subr.bf16.mxu0 0
    %518 = vmatpush1.bf16.msra.mxu0 0
    %519 = vmatprep.subr.bf16.mxu0 0
    %520 = vmatpush1.bf16.msra.mxu0 0
    %521 = vmatprep.subr.bf16.mxu0 0
    %522 = vmatpush1.bf16.msra.mxu0 0
    %523 = vmatprep.subr.bf16.mxu0 0
    %524 = vmatpush1.bf16.msra.mxu0 0
    %525 = vmatprep.subr.bf16.mxu0 0
    %526 = vmatpush1.bf16.msra.mxu0 0
    %527 = vmatprep.subr.bf16.mxu0 0
    %528 = vmatpush1.bf16.msra.mxu0 0
    %529 = vmatprep.mubr.bf16.mxu0 0
    %530 = vmatmul.mubr.bf16.gmra.mrb[0].mxu0 %v425
    %v531 = vpop.f32.mrb[0].mxu0
    %v532 = vadd.f32 %v447, %v531
    %v533 = vpop.f32.mrb[0].mxu0
    %v534 = vpop.f32.mrb[0].mxu0
    %v535 = vpop.f32.mrb[0].mxu0
    %536 = vdwg.mxu0
    %v537 = vpack.c.bf16 %v532, %v532
    %v538 = vld [vmem:[#allocation4] sm:$0xf]
    %v539 = vld [vmem:[#allocation4 + $0x4] sm:$0xf]
    %v540 = vld [vmem:[#allocation4 + $0x8] sm:$0xf]
    %v541 = vld [vmem:[#allocation4 + $0xc] sm:$0xf]
    %v542 = vld [vmem:[#allocation4 + $0x10] sm:$0xf]
    %v543 = vld [vmem:[#allocation4 + $0x14] sm:$0xf]
    %v544 = vld [vmem:[#allocation4 + $0x18] sm:$0xf]
    %v545 = vld [vmem:[#allocation4 + $0x1c] sm:$0xf]
    %v546 = vld [vmem:[#allocation4 + $0x20] sm:$0xf]
    %v547 = vld [vmem:[#allocation4 + $0x24] sm:$0xf]
    %v548 = vld [vmem:[#allocation4 + $0x28] sm:$0xf]
    %v549 = vld [vmem:[#allocation4 + $0x2c] sm:$0xf]
    %v550 = vld [vmem:[#allocation4 + $0x30] sm:$0xf]
    %v551 = vld [vmem:[#allocation4 + $0x34] sm:$0xf]
    %v552 = vld [vmem:[#allocation4 + $0x38] sm:$0xf]
    %v553 = vld [vmem:[#allocation4 + $0x3c] sm:$0xf]
    %v554 = vld [vmem:[%s6] sm:$0x1]
    %v556 = vlaneseq
    %v557 = vshrl.u32 %v556, 7
    %v558 = vsub.s32 0, %v557
    %v559 = vrot.slane %v554, %v558
    %v577 = vunpack.c.l.b16 %v538
    %v578 = vunpack.c.l.b16 %v539
    %v579 = vunpack.c.l.b16 %v540
    %v580 = vunpack.c.l.b16 %v541
    %v581 = vunpack.c.l.b16 %v542
    %v582 = vunpack.c.l.b16 %v543
    %v583 = vunpack.c.l.b16 %v544
    %v584 = vunpack.c.l.b16 %v545
    %v585 = vunpack.c.l.b16 %v546
    %v586 = vunpack.c.l.b16 %v547
    %v587 = vunpack.c.l.b16 %v548
    %v588 = vunpack.c.l.b16 %v549
    %v589 = vunpack.c.l.b16 %v550
    %v590 = vunpack.c.l.b16 %v551
    %v591 = vunpack.c.l.b16 %v552
    %v592 = vunpack.c.l.b16 %v553
    %v593 = vpack.c.b16 %v578, %v577
    %v594 = vpack.c.b16 %v580, %v579
    %v595 = vpack.c.b16 %v582, %v581
    %v596 = vpack.c.b16 %v584, %v583
    %v597 = vpack.c.b16 %v586, %v585
    %v598 = vpack.c.b16 %v588, %v587
    %v599 = vpack.c.b16 %v590, %v589
    %v600 = vpack.c.b16 %v592, %v591
    %609 = vmatprep.subr.bf16.mxu0 0
    %610 = vmatpush1.bf16.msra.mxu0 %v593
    %611 = vmatprep.subr.bf16.mxu0 0
    %612 = vmatpush1.bf16.msra.mxu0 %v594
    %613 = vmatprep.subr.bf16.mxu0 0
    %614 = vmatpush1.bf16.msra.mxu0 %v595
    %615 = vmatprep.subr.bf16.mxu0 0
    %616 = vmatpush1.bf16.msra.mxu0 %v596
    %617 = vmatprep.subr.bf16.mxu0 0
    %618 = vmatpush1.bf16.msra.mxu0 %v597
    %619 = vmatprep.subr.bf16.mxu0 0
    %620 = vmatpush1.bf16.msra.mxu0 %v598
    %621 = vmatprep.subr.bf16.mxu0 0
    %622 = vmatpush1.bf16.msra.mxu0 %v599
    %623 = vmatprep.subr.bf16.mxu0 0
    %624 = vmatpush1.bf16.msra.mxu0 %v600
    %625 = vmatprep.subr.bf16.mxu0 0
    %626 = vmatpush1.bf16.msra.mxu0 0
    %627 = vmatprep.subr.bf16.mxu0 0
    %628 = vmatpush1.bf16.msra.mxu0 0
    %629 = vmatprep.subr.bf16.mxu0 0
    %630 = vmatpush1.bf16.msra.mxu0 0
    %631 = vmatprep.subr.bf16.mxu0 0
    %632 = vmatpush1.bf16.msra.mxu0 0
    %633 = vmatprep.subr.bf16.mxu0 0
    %634 = vmatpush1.bf16.msra.mxu0 0
    %635 = vmatprep.subr.bf16.mxu0 0
    %636 = vmatpush1.bf16.msra.mxu0 0
    %637 = vmatprep.subr.bf16.mxu0 0
    %638 = vmatpush1.bf16.msra.mxu0 0
    %639 = vmatprep.subr.bf16.mxu0 0
    %640 = vmatpush1.bf16.msra.mxu0 0
    %641 = vmatprep.mubr.bf16.mxu0 0
    %642 = vmatmul.mubr.bf16.gmra.mrb[0].mxu0 %v537
    %v643 = vpop.f32.mrb[0].mxu0
    %v644 = vadd.f32 %v559, %v643
    %v645 = vpop.f32.mrb[0].mxu0
    %v646 = vpop.f32.mrb[0].mxu0
    %v647 = vpop.f32.mrb[0].mxu0
    %648 = vdwg.mxu0
    %v649 = vpack.c.bf16 %v644, %v644
    %650 = vst [vmem:[%s7] sm:$0x1] %v649
    // Predicated region
    $region38: #{classification_model_forward.1} parent=1 // pred_check
      _
    $region39: #{classification_model_forward.1} parent=1 // pred_check_branch
      %652 = sbr.rel (0) target = $region41
    $region40: #{classification_model_forward.1} parent=1 // pred_region
      _
    $region41: #{classification_model_forward.1} parent=1 // pred_fallthru
      _
    // Predicated region
    $region42: #{classification_model_forward.1} parent=1 // pred_check
      _
    $region43: #{classification_model_forward.1} parent=1 // pred_check_branch
      %654 = sbr.rel (0) target = $region45
    $region44: #{classification_model_forward.1} parent=1 // pred_region
      _
    $region45: #{classification_model_forward.1} parent=1 // pred_fallthru
      _
    %655 = vsyncpa [#allocation3], 1
    %656 = vsyncpa [#allocation5], 1

</llo_original>
